<compile_context>
chip_gen: v7x
topology: tpu7x:2x2x1
jax: 0.10.0
libtpu: 0.0.40
codegen_flags: <defaults>
</compile_context>

<pallas_src>
import functools

import jax
import jax.numpy as jnp
from jax.experimental import pallas as pl
from jax.experimental.pallas import tpu as pltpu


def _round_up(x, m):
    return (x + m - 1) // m * m


def _pad2(x, r, c):
    return jnp.pad(x, ((0, r - x.shape[0]), (0, c - x.shape[1])))


# --------------------------------------------------------------------------- #
# Phase 1: word = q @ Wq   (vocab reduction; Wq streamed exactly once)
# --------------------------------------------------------------------------- #
def _word_embed_kernel(q_ref, wq_ref, word_ref, *, tk):
    k = pl.program_id(0)

    @pl.when(k == 0)
    def _init():
        word_ref[...] = jnp.zeros_like(word_ref)

    start = pl.multiple_of(k * tk, tk)
    word_ref[...] += jnp.dot(q_ref[:, pl.ds(start, tk)], wq_ref[...],
                             preferred_element_type=jnp.float32)


# --------------------------------------------------------------------------- #
# Phase 2: out = img @ Wa_img + word @ Wa_word + ba_fused   (j-parallel)
# --------------------------------------------------------------------------- #
def _answer_kernel(img_ref, word_ref, wa_img_ref, wa_word_ref, ba_ref, out_ref):
    img_part = jnp.dot(img_ref[...], wa_img_ref[...],
                       preferred_element_type=jnp.float32)
    word_part = jnp.dot(word_ref[...], wa_word_ref[...].astype(jnp.float32),
                        preferred_element_type=jnp.float32)
    out_ref[...] = img_part + word_part + ba_ref[...]


# --------------------------------------------------------------------------- #
# One-time parameter preparation (hoisted out of the per-call forward).
# --------------------------------------------------------------------------- #
def prepare_params(params, *, tn=512, tk=2048):
    """Fuse bq into ba, pad to lane-aligned shapes, cast weights to bf16. Run once."""
    Qd, F = params["wq"].shape
    A = params["ba"].shape[-1]

    tn = min(tn, _round_up(A, 128))
    tk = min(tk, _round_up(Qd, 128))
    F_p = _round_up(F, 128)
    Q_p = _round_up(Qd, tk)
    A_p = _round_up(A, tn)

    # Exact f32 bias fusion: ba_fused = ba + bq @ Wa_word.
    ba_fused = (params["ba"].astype(jnp.float32)
                + params["bq"].astype(jnp.float32)
                @ params["wa_word"].astype(jnp.float32))

    prepped = {
        "wq": _pad2(params["wq"].astype(jnp.bfloat16), Q_p, F_p),
        "wa_img": _pad2(params["wa_img"].astype(jnp.bfloat16), F_p, A_p),
        "wa_word": _pad2(params["wa_word"].astype(jnp.bfloat16), F_p, A_p),
        "ba": _pad2(ba_fused, 1, A_p),
    }
    cfg = dict(answer_dict_size=A, tn=tn, tk=tk)
    return prepped, cfg


# --------------------------------------------------------------------------- #
# Forward
# --------------------------------------------------------------------------- #
@functools.partial(jax.jit, static_argnames=("answer_dict_size", "tn", "tk"))
def simple_baseline_forward(image_features, question_encoding, prepped, *,
                            answer_dict_size, tn, tk):
    """image_features: [B, F], question_encoding: [B, Qd] -> logits [B, A] (f32)."""
    B, _ = image_features.shape
    wq_p = prepped["wq"]
    wa_img_p = prepped["wa_img"]
    wa_word_p = prepped["wa_word"]
    ba_p = prepped["ba"]

    Q_p, F_p = wq_p.shape
    A_p = wa_img_p.shape[1]
    B_p = _round_up(B, 8)

    # Per-call activation padding only (tiny).
    img_p = _pad2(image_features.astype(jnp.bfloat16), B_p, F_p)
    q_p = _pad2(question_encoding.astype(jnp.bfloat16), B_p, Q_p)

    nk = Q_p // tk
    nj = A_p // tn

    # ---- phase 1: word embedding (Wq streamed once over the vocab axis) ---- #
    word = pl.pallas_call(
        functools.partial(_word_embed_kernel, tk=tk),
        out_shape=jax.ShapeDtypeStruct((B_p, F_p), jnp.float32),
        grid_spec=pltpu.PrefetchScalarGridSpec(
            num_scalar_prefetch=0,
            grid=(nk,),
            in_specs=[
                pl.BlockSpec((B_p, Q_p), lambda k: (0, 0)),   # q fully resident
                pl.BlockSpec((tk, F_p), lambda k: (k, 0)),    # Wq tile (once per k)
            ],
            out_specs=pl.BlockSpec((B_p, F_p), lambda k: (0, 0)),  # resident acc
        ),
        compiler_params=pltpu.CompilerParams(
            dimension_semantics=("arbitrary",)),
        cost_estimate=pl.CostEstimate(
            flops=2 * B_p * Q_p * F_p,
            transcendentals=0,
            bytes_accessed=2 * (B_p * Q_p + Q_p * F_p) + 4 * B_p * F_p),
    )(q_p, wq_p)

    # ---- phase 2: answer head (Wa halves streamed once over output tiles) -- #
    out = pl.pallas_call(
        _answer_kernel,
        out_shape=jax.ShapeDtypeStruct((B_p, A_p), jnp.float32),
        grid_spec=pltpu.PrefetchScalarGridSpec(
            num_scalar_prefetch=0,
            grid=(nj,),
            in_specs=[
                pl.BlockSpec((B_p, F_p), lambda j: (0, 0)),   # img (resident)
                pl.BlockSpec((B_p, F_p), lambda j: (0, 0)),   # word (resident)
                pl.BlockSpec((F_p, tn), lambda j: (0, j)),    # Wa image half tile
                pl.BlockSpec((F_p, tn), lambda j: (0, j)),    # Wa word half tile
                pl.BlockSpec((1, tn), lambda j: (0, j)),      # fused bias tile
            ],
            out_specs=pl.BlockSpec((B_p, tn), lambda j: (0, j)),
        ),
        compiler_params=pltpu.CompilerParams(
            dimension_semantics=("parallel",)),
        cost_estimate=pl.CostEstimate(
            flops=4 * B_p * F_p * A_p,
            transcendentals=0,
            bytes_accessed=(2 * B_p * F_p + 4 * B_p * F_p
                            + 2 * 2 * F_p * A_p + 4 * A_p + 4 * B_p * A_p)),
    )(img_p, word, wa_img_p, wa_word_p, ba_p)

    return out[:B, :answer_dict_size]


# --------------------------------------------------------------------------- #
# Parameter init + pure-JAX reference
# --------------------------------------------------------------------------- #
def init_params(key, question_dict_size, answer_dict_size, word_feature_size):
    """Deterministic synthetic parameters (shapes match the nn.Linear layers).

    Weights stored pre-transposed ([in, out]) and in bf16; biases in f32.
    """
    k1, k2, k3, k4 = jax.random.split(key, 4)
    wq = (jax.random.normal(k1, (question_dict_size, word_feature_size), jnp.float32)
          * 0.02).astype(jnp.bfloat16)
    bq = jax.random.normal(k2, (1, word_feature_size), jnp.float32) * 0.02
    wa = (jax.random.normal(k3, (2 * word_feature_size, answer_dict_size), jnp.float32)
          * 0.02).astype(jnp.bfloat16)
    ba = jax.random.normal(k4, (1, answer_dict_size), jnp.float32) * 0.02
    return {
        "wq": wq, "bq": bq,
        "wa_img": wa[:word_feature_size],
        "wa_word": wa[word_feature_size:],
        "ba": ba,
    }


def reference_forward(image_features, question_encoding, params):
    """Pure-JAX reference: exact module math (concat form) on the bf16 operands."""
    img = image_features.astype(jnp.bfloat16).astype(jnp.float32)
    q = question_encoding.astype(jnp.bfloat16).astype(jnp.float32)
    wq = params["wq"].astype(jnp.float32)
    wa = jnp.concatenate([params["wa_img"], params["wa_word"]],
                         axis=0).astype(jnp.float32)
    word = q @ wq + params["bq"].astype(jnp.float32)
    combined = jnp.concatenate([img, word], axis=1)
    return combined @ wa + params["ba"].astype(jnp.float32)


if __name__ == "__main__":
    # Small shapes consistent with the module's forward (image_feature=True).
    B = 2          # batch
    Q_DICT = 64    # question_dict_size (BoW vocab)
    A_DICT = 16    # answer_dict_size
    F = 32         # word_feature_size (== image feature dim)

    key = jax.random.PRNGKey(0)
    k_img, k_q, k_p = jax.random.split(key, 3)

    image_features = jax.random.normal(k_img, (B, F), jnp.float32)
    question_encoding = jax.random.normal(k_q, (B, Q_DICT), jnp.float32)
    params = init_params(k_p, Q_DICT, A_DICT, F)

    # One-time weight preparation (bias fusion, padding, bf16 cast).
    prepped, cfg = prepare_params(params)

    out = simple_baseline_forward(image_features, question_encoding, prepped, **cfg)
    out = jax.block_until_ready(out)

    ref = reference_forward(image_features, question_encoding, params)
    assert out.shape == (B, A_DICT)
    assert jnp.allclose(out, ref, atol=1e-2, rtol=1e-2), "mismatch vs JAX reference"

    print("KERNEL_OK")
</pallas_src>

<mosaic_0001>
module attributes {stable_mosaic.version = 11 : i64} {
  func.func @_answer_kernel(%arg0: i32, %arg1: memref<8x128xbf16, #tpu.memory_space<vmem>>, %arg2: memref<8x128xf32, #tpu.memory_space<vmem>>, %arg3: memref<128x128xbf16, #tpu.memory_space<vmem>>, %arg4: memref<128x128xbf16, #tpu.memory_space<vmem>>, %arg5: memref<1x128xf32, #tpu.memory_space<vmem>>, %arg6: memref<8x128xf32, #tpu.memory_space<vmem>>) attributes {dimension_semantics = [#tpu.dimension_semantics<parallel>], iteration_bounds = array<i64: 1>, scalar_prefetch = 0 : i64, scratch_operands = 0 : i64, tpu.core_type = #tpu.core_type<tc>, window_params = [{pipeline_mode = #tpu.pipeline_mode<synchronous>, transform_indices = @transform_0, window_bounds = array<i64: 8, 128>}, {pipeline_mode = #tpu.pipeline_mode<synchronous>, transform_indices = @transform_1, window_bounds = array<i64: 8, 128>}, {transform_indices = @transform_2, window_bounds = array<i64: 128, 128>}, {transform_indices = @transform_3, window_bounds = array<i64: 128, 128>}, {transform_indices = @transform_4, window_bounds = array<i64: 1, 128>}, {transform_indices = @transform_5, window_bounds = array<i64: 8, 128>}]} {
    %c0 = arith.constant 0 : index
    %c0_0 = arith.constant 0 : index
    %0 = vector.load %arg1[%c0, %c0_0] : memref<8x128xbf16, #tpu.memory_space<vmem>>, vector<8x128xbf16>
    %c0_1 = arith.constant 0 : index
    %c0_2 = arith.constant 0 : index
    %1 = vector.load %arg3[%c0_1, %c0_2] : memref<128x128xbf16, #tpu.memory_space<vmem>>, vector<128x128xbf16>
    %cst = arith.constant dense<0.000000e+00> : vector<8x128xf32>
    %2 = tpu.matmul %0, %1, %cst {dimension_numbers = #tpu.dot_dimension_numbers<[1], [0], [0], [1], [0, 0, 1, 1], [], []>} : vector<8x128xbf16>, vector<128x128xbf16>, vector<8x128xf32> -> vector<8x128xf32>
    %c0_3 = arith.constant 0 : index
    %c0_4 = arith.constant 0 : index
    %3 = vector.load %arg2[%c0_3, %c0_4] : memref<8x128xf32, #tpu.memory_space<vmem>>, vector<8x128xf32>
    %c0_5 = arith.constant 0 : index
    %c0_6 = arith.constant 0 : index
    %4 = vector.load %arg4[%c0_5, %c0_6] : memref<128x128xbf16, #tpu.memory_space<vmem>>, vector<128x128xbf16>
    %5 = arith.extf %4 : vector<128x128xbf16> to vector<128x128xf32>
    %cst_7 = arith.constant dense<0.000000e+00> : vector<8x128xf32>
    %6 = tpu.matmul %3, %5, %cst_7 {dimension_numbers = #tpu.dot_dimension_numbers<[1], [0], [0], [1], [0, 0, 1, 1], [], []>} : vector<8x128xf32>, vector<128x128xf32>, vector<8x128xf32> -> vector<8x128xf32>
    %7 = arith.addf %2, %6 : vector<8x128xf32>
    %c0_8 = arith.constant 0 : index
    %c0_9 = arith.constant 0 : index
    %8 = vector.load %arg5[%c0_8, %c0_9] : memref<1x128xf32, #tpu.memory_space<vmem>>, vector<1x128xf32>
    %9 = vector.broadcast %8 : vector<1x128xf32> to vector<8x128xf32>
    %10 = arith.addf %7, %9 : vector<8x128xf32>
    %c0_10 = arith.constant 0 : index
    %c0_11 = arith.constant 0 : index
    %11 = vector.load %arg6[%c0_10, %c0_11] : memref<8x128xf32, #tpu.memory_space<vmem>>, vector<8x128xf32>
    tpu.vector_store %arg6[%c0_10, %c0_11], %10 {strides = array<i32>} : memref<8x128xf32, #tpu.memory_space<vmem>>, vector<8x128xf32>,
    return
  }
  func.func @transform_0(%arg0: i32) -> (i32, i32) {
    %c0_i32 = arith.constant 0 : i32
    %c0_i32_0 = arith.constant 0 : i32
    %c0_i32_1 = arith.constant 0 : i32
    return %c0_i32, %c0_i32_0 : i32, i32
  }
  func.func @transform_1(%arg0: i32) -> (i32, i32) {
    %c0_i32 = arith.constant 0 : i32
    %c0_i32_0 = arith.constant 0 : i32
    %c0_i32_1 = arith.constant 0 : i32
    return %c0_i32, %c0_i32_0 : i32, i32
  }
  func.func @transform_2(%arg0: i32) -> (i32, i32) {
    %c0_i32 = arith.constant 0 : i32
    %c0_i32_0 = arith.constant 0 : i32
    return %c0_i32, %arg0 : i32, i32
  }
  func.func @transform_3(%arg0: i32) -> (i32, i32) {
    %c0_i32 = arith.constant 0 : i32
    %c0_i32_0 = arith.constant 0 : i32
    return %c0_i32, %arg0 : i32, i32
  }
  func.func @transform_4(%arg0: i32) -> (i32, i32) {
    %c0_i32 = arith.constant 0 : i32
    %c0_i32_0 = arith.constant 0 : i32
    return %c0_i32, %arg0 : i32, i32
  }
  func.func @transform_5(%arg0: i32) -> (i32, i32) {
    %c0_i32 = arith.constant 0 : i32
    %c0_i32_0 = arith.constant 0 : i32
    return %c0_i32, %arg0 : i32, i32
  }
}

module attributes {stable_mosaic.version = 11 : i64} {
  func.func @_word_embed_kernel(%arg0: i32, %arg1: memref<8x128xbf16, #tpu.memory_space<vmem>>, %arg2: memref<128x128xbf16, #tpu.memory_space<vmem>>, %arg3: memref<8x128xf32, #tpu.memory_space<vmem>>) attributes {dimension_semantics = [#tpu.dimension_semantics<arbitrary>], iteration_bounds = array<i64: 1>, scalar_prefetch = 0 : i64, scratch_operands = 0 : i64, tpu.core_type = #tpu.core_type<tc>, window_params = [{pipeline_mode = #tpu.pipeline_mode<synchronous>, transform_indices = @transform_0, window_bounds = array<i64: 8, 128>}, {transform_indices = @transform_1, window_bounds = array<i64: 128, 128>}, {pipeline_mode = #tpu.pipeline_mode<synchronous>, transform_indices = @transform_2, window_bounds = array<i64: 8, 128>}]} {
    %c0_i32 = arith.constant 0 : i32
    %0 = arith.cmpi eq, %arg0, %c0_i32 : i32
    %1 = arith.extui %0 : i1 to i32
    %c0_i32_0 = arith.constant 0 : i32
    %2 = arith.cmpi ne, %1, %c0_i32_0 : i32
    scf.if %2 {
      %cst_7 = arith.constant 0.000000e+00 : f32
      %12 = vector.broadcast %cst_7 : f32 to vector<8x128xf32>
      %c0_8 = arith.constant 0 : index
      %c0_9 = arith.constant 0 : index
      %13 = vector.load %arg3[%c0_8, %c0_9] : memref<8x128xf32, #tpu.memory_space<vmem>>, vector<8x128xf32>
      tpu.vector_store %arg3[%c0_8, %c0_9], %12 {strides = array<i32>} : memref<8x128xf32, #tpu.memory_space<vmem>>, vector<8x128xf32>,
    } else {
    }
    %c128_i32 = arith.constant 128 : i32
    %3 = arith.muli %arg0, %c128_i32 : i32
    %4 = tpu.assume_multiple %3, 128 : i32
    %c0 = arith.constant 0 : index
    %c0_1 = arith.constant 0 : index
    %5 = vector.load %arg3[%c0, %c0_1] : memref<8x128xf32, #tpu.memory_space<vmem>>, vector<8x128xf32>
    %c0_2 = arith.constant 0 : index
    %6 = arith.index_cast %4 : i32 to index
    %7 = vector.load %arg1[%c0_2, %6] : memref<8x128xbf16, #tpu.memory_space<vmem>>, vector<8x128xbf16>
    %c0_3 = arith.constant 0 : index
    %c0_4 = arith.constant 0 : index
    %8 = vector.load %arg2[%c0_3, %c0_4] : memref<128x128xbf16, #tpu.memory_space<vmem>>, vector<128x128xbf16>
    %cst = arith.constant dense<0.000000e+00> : vector<8x128xf32>
    %9 = tpu.matmul %7, %8, %cst {dimension_numbers = #tpu.dot_dimension_numbers<[1], [0], [0], [1], [0, 0, 1, 1], [], []>} : vector<8x128xbf16>, vector<128x128xbf16>, vector<8x128xf32> -> vector<8x128xf32>
    %10 = arith.addf %5, %9 : vector<8x128xf32>
    %c0_5 = arith.constant 0 : index
    %c0_6 = arith.constant 0 : index
    %11 = vector.load %arg3[%c0_5, %c0_6] : memref<8x128xf32, #tpu.memory_space<vmem>>, vector<8x128xf32>
    tpu.vector_store %arg3[%c0_5, %c0_6], %10 {strides = array<i32>} : memref<8x128xf32, #tpu.memory_space<vmem>>, vector<8x128xf32>,
    return
  }
  func.func @transform_0(%arg0: i32) -> (i32, i32) {
    %c0_i32 = arith.constant 0 : i32
    %c0_i32_0 = arith.constant 0 : i32
    %c0_i32_1 = arith.constant 0 : i32
    return %c0_i32, %c0_i32_0 : i32, i32
  }
  func.func @transform_1(%arg0: i32) -> (i32, i32) {
    %c0_i32 = arith.constant 0 : i32
    %c0_i32_0 = arith.constant 0 : i32
    return %arg0, %c0_i32 : i32, i32
  }
  func.func @transform_2(%arg0: i32) -> (i32, i32) {
    %c0_i32 = arith.constant 0 : i32
    %c0_i32_0 = arith.constant 0 : i32
    %c0_i32_1 = arith.constant 0 : i32
    return %c0_i32, %c0_i32_0 : i32, i32
  }
}

</mosaic_0001>

<llo_original>
// kernel: simple_baseline_forward.3
$region0: #{simple_baseline_forward.3}
  #allocation0 [shape = 'u32[]', space=smem, size = 0x4, offset = 0x4, fixed_abs, tag = 'smem constant byte address 0x4 - core index']
  #allocation1 [shape = 'u32[144,128]{1,0:T(1,128)}', space=vmem, size = 0x12000, scoped, tag = 'internal scratch']
  %s0 = inlined_call_operand.vmem [shape: bf16[8,128], index: 0, kind: input, shape index: {}]
  %s1 = inlined_call_operand.vmem [shape: f32[8,128], index: 1, kind: input, shape index: {}]
  %s2 = inlined_call_operand.vmem [shape: bf16[128,128], index: 2, kind: input, shape index: {}]
  %s3 = inlined_call_operand.hbm [shape: bf16[128,128], index: 3, kind: input, shape index: {}]
  %s4 = inlined_call_operand.vmem [shape: f32[1,128], index: 4, kind: input, shape index: {}]
  %s5 = inlined_call_operand.vmem [shape: f32[8,128], index: 5, kind: output, shape index: {}]
  %s6 = sld [smem:[#allocation0]]
  $region34: #{simple_baseline_forward.3} parent=0
    _
  %s8 = ssub.s32 1, %s6
  %s9 = scalar_select 0, %s8, %s6
  $region1: #{simple_baseline_forward.3} parent=0
    #allocation2 [shape = 'u8[32768]{0}', space=vmem, size = 0x8000, scoped, tag = 'input window, operand 3, single buffered']
    #allocation3 [shape = 's32[1]{0}', space=sflag, size = 0x4, scoped, tag = 'scoped memory for simple_baseline_forward.3']
    %10 = vsyncpa [#allocation3], 0
    // Predicated region
    $region2: #{simple_baseline_forward.3} parent=1 // pred_check
      _
    $region3: #{simple_baseline_forward.3} parent=1 // pred_check_branch
      %12 = sbr.rel (0) target = $region5
    $region4: #{simple_baseline_forward.3} parent=1 // pred_region
      _
    $region5: #{simple_baseline_forward.3} parent=1 // pred_fallthru
      _
    // Predicated region
    $region6: #{simple_baseline_forward.3} parent=1 // pred_check
      _
    $region7: #{simple_baseline_forward.3} parent=1 // pred_check_branch
      %14 = sbr.rel (0) target = $region9
    $region8: #{simple_baseline_forward.3} parent=1 // pred_region
      _
    $region9: #{simple_baseline_forward.3} parent=1 // pred_fallthru
      _
    // Predicated region
    $region10: #{simple_baseline_forward.3} parent=1 // pred_check
      _
    $region11: #{simple_baseline_forward.3} parent=1 // pred_check_branch
      %16 = sbr.rel (0) target = $region13
    $region12: #{simple_baseline_forward.3} parent=1 // pred_region
      _
    $region13: #{simple_baseline_forward.3} parent=1 // pred_fallthru
      _
    // Predicated region
    $region14: #{simple_baseline_forward.3} parent=1 // pred_check
      _
    $region15: #{simple_baseline_forward.3} parent=1 // pred_check_branch
      %18 = sbr.rel (0) target = $region17
    $region16: #{simple_baseline_forward.3} parent=1 // pred_region
      %s20 = ssub.s32 1024, 1024
      %21 = vsyncadd [#allocation3], %s20
      %s22 = sshll.u32 [#allocation2], 4
      %s23 = int_to_ptr.vmem [resolvable:$true] %s22
      %28 = dma.hbm_to_vmem [thread:$0]  %s3, 1024, %s23, [#allocation3], 64, 64, 4
    $region17: #{simple_baseline_forward.3} parent=1 // pred_fallthru
      _
    // Predicated region
    $region18: #{simple_baseline_forward.3} parent=1 // pred_check
      _
    $region19: #{simple_baseline_forward.3} parent=1 // pred_check_branch
      %30 = sbr.rel (0) target = $region21
    $region20: #{simple_baseline_forward.3} parent=1 // pred_region
      _
    $region21: #{simple_baseline_forward.3} parent=1 // pred_fallthru
      _
    // Predicated region
    $region22: #{simple_baseline_forward.3} parent=1 // pred_check
      _
    $region23: #{simple_baseline_forward.3} parent=1 // pred_check_branch
      %32 = sbr.rel (0) target = $region25
    $region24: #{simple_baseline_forward.3} parent=1 // pred_region
      %33 = dma.done [#allocation3], 1024
    $region25: #{simple_baseline_forward.3} parent=1 // pred_fallthru
      _
    %v35 = vld [vmem:[%s0] sm:$0xf]
    %v36 = vld [vmem:[%s2] sm:$0xf]
    %v37 = vld [vmem:[%s2 + $0x4] sm:$0xf]
    %v38 = vld [vmem:[%s2 + $0x8] sm:$0xf]
    %v39 = vld [vmem:[%s2 + $0xc] sm:$0xf]
    %v40 = vld [vmem:[%s2 + $0x10] sm:$0xf]
    %v41 = vld [vmem:[%s2 + $0x14] sm:$0xf]
    %v42 = vld [vmem:[%s2 + $0x18] sm:$0xf]
    %v43 = vld [vmem:[%s2 + $0x1c] sm:$0xf]
    %v44 = vld [vmem:[%s2 + $0x20] sm:$0xf]
    %v45 = vld [vmem:[%s2 + $0x24] sm:$0xf]
    %v46 = vld [vmem:[%s2 + $0x28] sm:$0xf]
    %v47 = vld [vmem:[%s2 + $0x2c] sm:$0xf]
    %v48 = vld [vmem:[%s2 + $0x30] sm:$0xf]
    %v49 = vld [vmem:[%s2 + $0x34] sm:$0xf]
    %v50 = vld [vmem:[%s2 + $0x38] sm:$0xf]
    %v51 = vld [vmem:[%s2 + $0x3c] sm:$0xf]
    %v52 = vld [vmem:[%s1] sm:$0xff]
    %v53 = vld [vmem:[#allocation2] sm:$0xf]
    %v54 = vld [vmem:[#allocation2 + $0x4] sm:$0xf]
    %v55 = vld [vmem:[#allocation2 + $0x8] sm:$0xf]
    %v56 = vld [vmem:[#allocation2 + $0xc] sm:$0xf]
    %v57 = vld [vmem:[#allocation2 + $0x10] sm:$0xf]
    %v58 = vld [vmem:[#allocation2 + $0x14] sm:$0xf]
    %v59 = vld [vmem:[#allocation2 + $0x18] sm:$0xf]
    %v60 = vld [vmem:[#allocation2 + $0x1c] sm:$0xf]
    %v61 = vld [vmem:[#allocation2 + $0x20] sm:$0xf]
    %v62 = vld [vmem:[#allocation2 + $0x24] sm:$0xf]
    %v63 = vld [vmem:[#allocation2 + $0x28] sm:$0xf]
    %v64 = vld [vmem:[#allocation2 + $0x2c] sm:$0xf]
    %v65 = vld [vmem:[#allocation2 + $0x30] sm:$0xf]
    %v66 = vld [vmem:[#allocation2 + $0x34] sm:$0xf]
    %v67 = vld [vmem:[#allocation2 + $0x38] sm:$0xf]
    %v68 = vld [vmem:[#allocation2 + $0x3c] sm:$0xf]
    %v69 = vunpack.c.l.bf16 %v53
    %v70 = vunpack.c.l.bf16 %v54
    %v71 = vunpack.c.l.bf16 %v55
    %v72 = vunpack.c.l.bf16 %v56
    %v73 = vunpack.c.l.bf16 %v57
    %v74 = vunpack.c.l.bf16 %v58
    %v75 = vunpack.c.l.bf16 %v59
    %v76 = vunpack.c.l.bf16 %v60
    %v77 = vunpack.c.l.bf16 %v61
    %v78 = vunpack.c.l.bf16 %v62
    %v79 = vunpack.c.l.bf16 %v63
    %v80 = vunpack.c.l.bf16 %v64
    %v81 = vunpack.c.l.bf16 %v65
    %v82 = vunpack.c.l.bf16 %v66
    %v83 = vunpack.c.l.bf16 %v67
    %v84 = vunpack.c.l.bf16 %v68
    %85 = vmatprep.subr.mxu0 0.0
    %86 = vmatpush1.msra.mxu0 %v69
    %87 = vmatprep.subr.mxu0 0.0
    %88 = vmatpush1.msra.mxu0 %v70
    %89 = vmatprep.subr.mxu0 0.0
    %90 = vmatpush1.msra.mxu0 %v71
    %91 = vmatprep.subr.mxu0 0.0
    %92 = vmatpush1.msra.mxu0 %v72
    %93 = vmatprep.subr.mxu0 0.0
    %94 = vmatpush1.msra.mxu0 %v73
    %95 = vmatprep.subr.mxu0 0.0
    %96 = vmatpush1.msra.mxu0 %v74
    %97 = vmatprep.subr.mxu0 0.0
    %98 = vmatpush1.msra.mxu0 %v75
    %99 = vmatprep.subr.mxu0 0.0
    %100 = vmatpush1.msra.mxu0 %v76
    %101 = vmatprep.subr.mxu0 0.0
    %102 = vmatpush1.msra.mxu0 %v77
    %103 = vmatprep.subr.mxu0 0.0
    %104 = vmatpush1.msra.mxu0 %v78
    %105 = vmatprep.subr.mxu0 0.0
    %106 = vmatpush1.msra.mxu0 %v79
    %107 = vmatprep.subr.mxu0 0.0
    %108 = vmatpush1.msra.mxu0 %v80
    %109 = vmatprep.subr.mxu0 0.0
    %110 = vmatpush1.msra.mxu0 %v81
    %111 = vmatprep.subr.mxu0 0.0
    %112 = vmatpush1.msra.mxu0 %v82
    %113 = vmatprep.subr.mxu0 0.0
    %114 = vmatpush1.msra.mxu0 %v83
    %115 = vmatprep.subr.mxu0 0.0
    %116 = vmatpush1.msra.mxu0 %v84
    %117 = vmatprep.subr.mxu0 0.0
    %118 = vmatpush1.msra.mxu0 0.0
    %119 = vmatprep.subr.mxu0 0.0
    %120 = vmatpush1.msra.mxu0 0.0
    %121 = vmatprep.subr.mxu0 0.0
    %122 = vmatpush1.msra.mxu0 0.0
    %123 = vmatprep.subr.mxu0 0.0
    %124 = vmatpush1.msra.mxu0 0.0
    %125 = vmatprep.subr.mxu0 0.0
    %126 = vmatpush1.msra.mxu0 0.0
    %127 = vmatprep.subr.mxu0 0.0
    %128 = vmatpush1.msra.mxu0 0.0
    %129 = vmatprep.subr.mxu0 0.0
    %130 = vmatpush1.msra.mxu0 0.0
    %131 = vmatprep.subr.mxu0 0.0
    %132 = vmatpush1.msra.mxu0 0.0
    %133 = vmatprep.subr.mxu0 0.0
    %134 = vmatpush1.msra.mxu0 0.0
    %135 = vmatprep.subr.mxu0 0.0
    %136 = vmatpush1.msra.mxu0 0.0
    %137 = vmatprep.subr.mxu0 0.0
    %138 = vmatpush1.msra.mxu0 0.0
    %139 = vmatprep.subr.mxu0 0.0
    %140 = vmatpush1.msra.mxu0 0.0
    %141 = vmatprep.subr.mxu0 0.0
    %142 = vmatpush1.msra.mxu0 0.0
    %143 = vmatprep.subr.mxu0 0.0
    %144 = vmatpush1.msra.mxu0 0.0
    %145 = vmatprep.subr.mxu0 0.0
    %146 = vmatpush1.msra.mxu0 0.0
    %147 = vmatprep.subr.mxu0 0.0
    %148 = vmatpush1.msra.mxu0 0.0
    %149 = vmatprep.mubr.f32.mxu0 0.0
    %150 = vmatmul.mubr.f32.gmra.mrb[0].mxu0 %v52
    %v151 = vpop.f32.mrb[0].mxu0
    %v152 = vadd.f32 0.0, %v151
    %v153 = vpop.f32.mrb[0].mxu0
    %154 = vdwg.mxu0
    %v171 = vunpack.c.l.b16 %v36
    %v172 = vunpack.c.l.b16 %v37
    %v173 = vunpack.c.l.b16 %v38
    %v174 = vunpack.c.l.b16 %v39
    %v175 = vunpack.c.l.b16 %v40
    %v176 = vunpack.c.l.b16 %v41
    %v177 = vunpack.c.l.b16 %v42
    %v178 = vunpack.c.l.b16 %v43
    %v179 = vunpack.c.l.b16 %v44
    %v180 = vunpack.c.l.b16 %v45
    %v181 = vunpack.c.l.b16 %v46
    %v182 = vunpack.c.l.b16 %v47
    %v183 = vunpack.c.l.b16 %v48
    %v184 = vunpack.c.l.b16 %v49
    %v185 = vunpack.c.l.b16 %v50
    %v186 = vunpack.c.l.b16 %v51
    %v187 = vpack.c.b16 %v172, %v171
    %v188 = vpack.c.b16 %v174, %v173
    %v189 = vpack.c.b16 %v176, %v175
    %v190 = vpack.c.b16 %v178, %v177
    %v191 = vpack.c.b16 %v180, %v179
    %v192 = vpack.c.b16 %v182, %v181
    %v193 = vpack.c.b16 %v184, %v183
    %v194 = vpack.c.b16 %v186, %v185
    %203 = vmatprep.subr.bf16.mxu0 0
    %204 = vmatpush1.bf16.msra.mxu0 %v187
    %205 = vmatprep.subr.bf16.mxu0 0
    %206 = vmatpush1.bf16.msra.mxu0 %v188
    %207 = vmatprep.subr.bf16.mxu0 0
    %208 = vmatpush1.bf16.msra.mxu0 %v189
    %209 = vmatprep.subr.bf16.mxu0 0
    %210 = vmatpush1.bf16.msra.mxu0 %v190
    %211 = vmatprep.subr.bf16.mxu0 0
    %212 = vmatpush1.bf16.msra.mxu0 %v191
    %213 = vmatprep.subr.bf16.mxu0 0
    %214 = vmatpush1.bf16.msra.mxu0 %v192
    %215 = vmatprep.subr.bf16.mxu0 0
    %216 = vmatpush1.bf16.msra.mxu0 %v193
    %217 = vmatprep.subr.bf16.mxu0 0
    %218 = vmatpush1.bf16.msra.mxu0 %v194
    %219 = vmatprep.subr.bf16.mxu0 0
    %220 = vmatpush1.bf16.msra.mxu0 0
    %221 = vmatprep.subr.bf16.mxu0 0
    %222 = vmatpush1.bf16.msra.mxu0 0
    %223 = vmatprep.subr.bf16.mxu0 0
    %224 = vmatpush1.bf16.msra.mxu0 0
    %225 = vmatprep.subr.bf16.mxu0 0
    %226 = vmatpush1.bf16.msra.mxu0 0
    %227 = vmatprep.subr.bf16.mxu0 0
    %228 = vmatpush1.bf16.msra.mxu0 0
    %229 = vmatprep.subr.bf16.mxu0 0
    %230 = vmatpush1.bf16.msra.mxu0 0
    %231 = vmatprep.subr.bf16.mxu0 0
    %232 = vmatpush1.bf16.msra.mxu0 0
    %233 = vmatprep.subr.bf16.mxu0 0
    %234 = vmatpush1.bf16.msra.mxu0 0
    %235 = vmatprep.mubr.bf16.mxu0 0
    %236 = vmatmul.mubr.bf16.gmra.mrb[0].mxu0 %v35
    %v237 = vpop.f32.mrb[0].mxu0
    %v238 = vadd.f32 %v152, %v237
    %v239 = vpop.f32.mrb[0].mxu0
    %v240 = vpop.f32.mrb[0].mxu0
    %v241 = vpop.f32.mrb[0].mxu0
    %242 = vdwg.mxu0
    %v243 = vld [vmem:[%s4] sm:$0x1]
    %v245 = vlaneseq
    %v246 = vshrl.u32 %v245, 7
    %v247 = vsub.s32 0, %v246
    %v248 = vrot.slane %v243, %v247
    %v250 = vadd.f32 %v238, %v248
    %251 = vst [vmem:[%s5] sm:$0xff] %v250
    // Predicated region
    $region26: #{simple_baseline_forward.3} parent=1 // pred_check
      _
    $region27: #{simple_baseline_forward.3} parent=1 // pred_check_branch
      %253 = sbr.rel (0) target = $region29
    $region28: #{simple_baseline_forward.3} parent=1 // pred_region
      _
    $region29: #{simple_baseline_forward.3} parent=1 // pred_fallthru
      _
    // Predicated region
    $region30: #{simple_baseline_forward.3} parent=1 // pred_check
      _
    $region31: #{simple_baseline_forward.3} parent=1 // pred_check_branch
      %255 = sbr.rel (0) target = $region33
    $region32: #{simple_baseline_forward.3} parent=1 // pred_region
      _
    $region33: #{simple_baseline_forward.3} parent=1 // pred_fallthru
      _
    %256 = vsyncpa [#allocation3], 1

// kernel: simple_baseline_forward.2
$region0: #{simple_baseline_forward.2}
  #allocation0 [shape = 'u32[]', space=smem, size = 0x4, offset = 0x4, fixed_abs, tag = 'smem constant byte address 0x4 - core index']
  #allocation1 [shape = 'u32[144,128]{1,0:T(1,128)}', space=vmem, size = 0x12000, scoped, tag = 'internal scratch']
  %s0 = inlined_call_operand.vmem [shape: bf16[8,128], index: 0, kind: input, shape index: {}]
  %s1 = inlined_call_operand.hbm [shape: bf16[128,128], index: 1, kind: input, shape index: {}]
  %s2 = inlined_call_operand.vmem [shape: f32[8,128], index: 2, kind: output, shape index: {}]
  %s3 = sld [smem:[#allocation0]]
  $region26: #{simple_baseline_forward.2} parent=0
    _
  %s5 = ssub.s32 1, %s3
  %s6 = scalar_select 0, %s5, %s3
  $region1: #{simple_baseline_forward.2} parent=0
    #allocation2 [shape = 'u8[32768]{0}', space=vmem, size = 0x8000, scoped, tag = 'input window, operand 1, single buffered']
    #allocation3 [shape = 's32[1]{0}', space=sflag, size = 0x4, scoped, tag = 'scoped memory for simple_baseline_forward.2']
    %7 = vsyncpa [#allocation3], 0
    // Predicated region
    $region2: #{simple_baseline_forward.2} parent=1 // pred_check
      _
    $region3: #{simple_baseline_forward.2} parent=1 // pred_check_branch
      %9 = sbr.rel (0) target = $region5
    $region4: #{simple_baseline_forward.2} parent=1 // pred_region
      _
    $region5: #{simple_baseline_forward.2} parent=1 // pred_fallthru
      _
    // Predicated region
    $region6: #{simple_baseline_forward.2} parent=1 // pred_check
      _
    $region7: #{simple_baseline_forward.2} parent=1 // pred_check_branch
      %11 = sbr.rel (0) target = $region9
    $region8: #{simple_baseline_forward.2} parent=1 // pred_region
      %s13 = ssub.s32 1024, 1024
      %14 = vsyncadd [#allocation3], %s13
      %s15 = sshll.u32 [#allocation2], 4
      %s16 = int_to_ptr.vmem [resolvable:$true] %s15
      %21 = dma.hbm_to_vmem [thread:$0]  %s1, 1024, %s16, [#allocation3], 64, 64, 4
    $region9: #{simple_baseline_forward.2} parent=1 // pred_fallthru
      _
    // Predicated region
    $region10: #{simple_baseline_forward.2} parent=1 // pred_check
      _
    $region11: #{simple_baseline_forward.2} parent=1 // pred_check_branch
      %23 = sbr.rel (0) target = $region13
    $region12: #{simple_baseline_forward.2} parent=1 // pred_region
      %24 = dma.done [#allocation3], 1024
    $region13: #{simple_baseline_forward.2} parent=1 // pred_fallthru
      _
    %p26 = scmp.eq.s32.totalorder 0, 0
    // Predicated region
    $region14: #{simple_baseline_forward.2} parent=1 // pred_check
      %p27 = pneg %p26
    $region15: #{simple_baseline_forward.2} parent=1 // pred_check_branch
      %29 = sbr.rel (%p27) target = $region17
    $region16: #{simple_baseline_forward.2} parent=1 // pred_region
      %30 = vst [vmem:[%s2] sm:$0xff] 0.0
    $region17: #{simple_baseline_forward.2} parent=1 // pred_fallthru
      _
    %s31 = smul.u32 0, 128
    %v32 = vld [vmem:[%s2] sm:$0xff]
    %s33 = sshra.s32 %s31, 7
    %s34 = sand.u32 %s31, 127
    %s35 = smul.addr %s33, 4
    %s36 = scalar_lea.vmem %s0, %s35
    %v37 = vld [vmem:[%s36] sm:$0xf]
    %v38 = vld [vmem:[#allocation2] sm:$0xf]
    %v39 = vld [vmem:[#allocation2 + $0x4] sm:$0xf]
    %v40 = vld [vmem:[#allocation2 + $0x8] sm:$0xf]
    %v41 = vld [vmem:[#allocation2 + $0xc] sm:$0xf]
    %v42 = vld [vmem:[#allocation2 + $0x10] sm:$0xf]
    %v43 = vld [vmem:[#allocation2 + $0x14] sm:$0xf]
    %v44 = vld [vmem:[#allocation2 + $0x18] sm:$0xf]
    %v45 = vld [vmem:[#allocation2 + $0x1c] sm:$0xf]
    %v46 = vld [vmem:[#allocation2 + $0x20] sm:$0xf]
    %v47 = vld [vmem:[#allocation2 + $0x24] sm:$0xf]
    %v48 = vld [vmem:[#allocation2 + $0x28] sm:$0xf]
    %v49 = vld [vmem:[#allocation2 + $0x2c] sm:$0xf]
    %v50 = vld [vmem:[#allocation2 + $0x30] sm:$0xf]
    %v51 = vld [vmem:[#allocation2 + $0x34] sm:$0xf]
    %v52 = vld [vmem:[#allocation2 + $0x38] sm:$0xf]
    %v53 = vld [vmem:[#allocation2 + $0x3c] sm:$0xf]
    %v70 = vunpack.c.l.b16 %v38
    %v71 = vunpack.c.l.b16 %v39
    %v72 = vunpack.c.l.b16 %v40
    %v73 = vunpack.c.l.b16 %v41
    %v74 = vunpack.c.l.b16 %v42
    %v75 = vunpack.c.l.b16 %v43
    %v76 = vunpack.c.l.b16 %v44
    %v77 = vunpack.c.l.b16 %v45
    %v78 = vunpack.c.l.b16 %v46
    %v79 = vunpack.c.l.b16 %v47
    %v80 = vunpack.c.l.b16 %v48
    %v81 = vunpack.c.l.b16 %v49
    %v82 = vunpack.c.l.b16 %v50
    %v83 = vunpack.c.l.b16 %v51
    %v84 = vunpack.c.l.b16 %v52
    %v85 = vunpack.c.l.b16 %v53
    %v86 = vpack.c.b16 %v71, %v70
    %v87 = vpack.c.b16 %v73, %v72
    %v88 = vpack.c.b16 %v75, %v74
    %v89 = vpack.c.b16 %v77, %v76
    %v90 = vpack.c.b16 %v79, %v78
    %v91 = vpack.c.b16 %v81, %v80
    %v92 = vpack.c.b16 %v83, %v82
    %v93 = vpack.c.b16 %v85, %v84
    %102 = vmatprep.subr.bf16.mxu0 0
    %103 = vmatpush1.bf16.msra.mxu0 %v86
    %104 = vmatprep.subr.bf16.mxu0 0
    %105 = vmatpush1.bf16.msra.mxu0 %v87
    %106 = vmatprep.subr.bf16.mxu0 0
    %107 = vmatpush1.bf16.msra.mxu0 %v88
    %108 = vmatprep.subr.bf16.mxu0 0
    %109 = vmatpush1.bf16.msra.mxu0 %v89
    %110 = vmatprep.subr.bf16.mxu0 0
    %111 = vmatpush1.bf16.msra.mxu0 %v90
    %112 = vmatprep.subr.bf16.mxu0 0
    %113 = vmatpush1.bf16.msra.mxu0 %v91
    %114 = vmatprep.subr.bf16.mxu0 0
    %115 = vmatpush1.bf16.msra.mxu0 %v92
    %116 = vmatprep.subr.bf16.mxu0 0
    %117 = vmatpush1.bf16.msra.mxu0 %v93
    %118 = vmatprep.subr.bf16.mxu0 0
    %119 = vmatpush1.bf16.msra.mxu0 0
    %120 = vmatprep.subr.bf16.mxu0 0
    %121 = vmatpush1.bf16.msra.mxu0 0
    %122 = vmatprep.subr.bf16.mxu0 0
    %123 = vmatpush1.bf16.msra.mxu0 0
    %124 = vmatprep.subr.bf16.mxu0 0
    %125 = vmatpush1.bf16.msra.mxu0 0
    %126 = vmatprep.subr.bf16.mxu0 0
    %127 = vmatpush1.bf16.msra.mxu0 0
    %128 = vmatprep.subr.bf16.mxu0 0
    %129 = vmatpush1.bf16.msra.mxu0 0
    %130 = vmatprep.subr.bf16.mxu0 0
    %131 = vmatpush1.bf16.msra.mxu0 0
    %132 = vmatprep.subr.bf16.mxu0 0
    %133 = vmatpush1.bf16.msra.mxu0 0
    %134 = vmatprep.mubr.bf16.mxu0 0
    %135 = vmatmul.mubr.bf16.gmra.mrb[0].mxu0 %v37
    %v136 = vpop.f32.mrb[0].mxu0
    %v137 = vadd.f32 0.0, %v136
    %v138 = vpop.f32.mrb[0].mxu0
    %v139 = vpop.f32.mrb[0].mxu0
    %v140 = vpop.f32.mrb[0].mxu0
    %141 = vdwg.mxu0
    %v142 = vadd.f32 %v32, %v137
    %143 = vst [vmem:[%s2] sm:$0xff] %v142
    // Predicated region
    $region18: #{simple_baseline_forward.2} parent=1 // pred_check
      _
    $region19: #{simple_baseline_forward.2} parent=1 // pred_check_branch
      %145 = sbr.rel (0) target = $region21
    $region20: #{simple_baseline_forward.2} parent=1 // pred_region
      _
    $region21: #{simple_baseline_forward.2} parent=1 // pred_fallthru
      _
    // Predicated region
    $region22: #{simple_baseline_forward.2} parent=1 // pred_check
      _
    $region23: #{simple_baseline_forward.2} parent=1 // pred_check_branch
      %147 = sbr.rel (0) target = $region25
    $region24: #{simple_baseline_forward.2} parent=1 // pred_region
      _
    $region25: #{simple_baseline_forward.2} parent=1 // pred_fallthru
      _
    %148 = vsyncpa [#allocation3], 1

</llo_original>
